<compile_context>
chip_gen: v6e
topology: v6e:2x2x1
jax: 0.10.0
libtpu: 0.0.40
codegen_flags: <defaults>
</compile_context>

<pallas_src>
import jax
import jax.numpy as jnp
from jax.experimental import pallas as pl
from jax.experimental.pallas import tpu as pltpu


# ---------------- token-kind vocabulary (synthetic, deterministic) ----------
KIND_PAD = 0
KIND_IDENTIFIER = 1
KIND_OPERATOR = 2
KIND_SEPARATOR = 3
KIND_KEYWORD = 4
NUM_TOKEN_KINDS = 8

KOS_VOCAB_SIZE = 50
KOS_PAD_IDX = 0

PACK = 4  # tokens packed per lane-dense super-row (4 * Dout = 128 lanes)


def _round_up(x, m):
    return (x + m - 1) // m * m


# ---------------------------- Pallas kernel ---------------------------------
def _embedder_kernel(x_ref, w1_ref, b1_ref, w2_ref, b2_ref, o_ref):
    """One tile of super-rows: fused projection + relu + extra linear + relu."""
    x = x_ref[...]                                    # (bm, PACK*(Dt+Dk)) bf16
    h = jnp.dot(x, w1_ref[...],
                preferred_element_type=jnp.float32) + b1_ref[...]
    h = jnp.maximum(h, 0.0)                           # relu (dropout = identity)
    h2 = jnp.dot(h, w2_ref[...],
                 preferred_element_type=jnp.float32) + b2_ref[...]
    o_ref[...] = jnp.maximum(h2, 0.0)                 # relu after last linear


def code_tokens_embedder_pallas(x, w1_blk, b1_blk, w2_blk, b2_blk,
                                *, block_tokens=2048):
    """x: (M, Din) bf16 fused per-token features.
       w1_blk: (PACK*Din, PACK*Dout) bf16 block-diag; w2_blk: (PACK*Dout,)^2 f32;
       b1_blk/b2_blk: (1, PACK*Dout) f32.  Returns (M, Dout) f32."""
    M, Din = x.shape
    Din_p = PACK * Din
    Dout_p = w1_blk.shape[1]
    Dout = Dout_p // PACK

    # Pack PACK consecutive tokens per row; pad row count to a tile multiple.
    n_rows = pl.cdiv(M, PACK)
    cand = _round_up(max(block_tokens // PACK, 8), 8)
    block_rows = min(cand, _round_up(n_rows, 8))      # keep >=1 grid step
    n_rows_pad = _round_up(n_rows, block_rows)
    m_pad = n_rows_pad * PACK
    if m_pad != M:
        x = jnp.pad(x, ((0, m_pad - M), (0, 0)))
    x_super = x.reshape(n_rows_pad, Din_p)            # free row-major reshape

    grid = (n_rows_pad // block_rows,)
    row_spec = lambda c: pl.BlockSpec((block_rows, c), lambda i: (i, 0))
    full_spec = lambda r, c: pl.BlockSpec((r, c), lambda i: (0, 0))

    y_super = pl.pallas_call(
        _embedder_kernel,
        out_shape=jax.ShapeDtypeStruct((n_rows_pad, Dout_p), jnp.float32),
        grid=grid,
        in_specs=[
            row_spec(Din_p),                 # packed bf16 token features
            full_spec(Din_p, Dout_p),        # block-diag projection weight
            full_spec(1, Dout_p),            # projection bias (tiled x4)
            full_spec(Dout_p, Dout_p),       # block-diag 2nd linear weight
            full_spec(1, Dout_p),            # 2nd bias (tiled x4)
        ],
        out_specs=row_spec(Dout_p),          # lane-dense 128-wide f32 stores
        compiler_params=pltpu.CompilerParams(
            dimension_semantics=("parallel",)),
    )(x_super, w1_blk, b1_blk, w2_blk, b2_blk)

    return y_super.reshape(m_pad, Dout)[:M]


# --------------------------- glue (plain JAX) --------------------------------
def _gather_and_select(params, token_type, kos_token_index,
                       identifier_index, encoded_identifiers):
    """Embedding gathers + masked_scatter_ emulation + kind select.
       Returns the fused per-token feature stream (M, Dt+Dk) float32."""
    tt = token_type.reshape(-1)
    tk_emb = params["kinds_table"][tt]                          # (M, Dt)
    kos_rows = params["kos_table"][kos_token_index]             # (Nkos, Dk)
    id_rows = encoded_identifiers[identifier_index]             # (Nid, Dk)

    is_id = (tt == KIND_IDENTIFIER)
    is_kos = ((tt == KIND_OPERATOR) | (tt == KIND_SEPARATOR)
              | (tt == KIND_KEYWORD))
    # masked_scatter_: k-th True position (row-major) consumes source row k.
    id_slot = jnp.cumsum(is_id.astype(jnp.int32)) - 1
    kos_slot = jnp.cumsum(is_kos.astype(jnp.int32)) - 1
    per_id = id_rows[jnp.clip(id_slot, 0, id_rows.shape[0] - 1)]
    per_kos = kos_rows[jnp.clip(kos_slot, 0, kos_rows.shape[0] - 1)]
    # masks are mutually exclusive; kos scatter happens last in the module.
    kos_or_id = jnp.where(is_kos[:, None], per_kos,
                          jnp.where(is_id[:, None], per_id, 0.0))
    return jnp.concatenate([tk_emb, kos_or_id], axis=-1)        # (M, Dt+Dk)
    # TODO(synk): the gathers could move in-kernel (tables as VMEM-resident
    # inputs + PrefetchScalarGridSpec slot indices) to skip the HBM round trip.


def code_tokens_embedder_forward(params, token_type, kos_token_index,
                                 identifier_index, encoded_identifiers,
                                 *, block_tokens=2048):
    """Mirrors CodeTokensEmbedder.forward (eval mode, relu, 2 linear layers)."""
    B, S = token_type.shape
    feats = _gather_and_select(params, token_type, kos_token_index,
                               identifier_index, encoded_identifiers)
    x = feats.astype(jnp.bfloat16)          # bf16 stream; f32 accumulation

    Dout = params["w2"].shape[0]
    eye = jnp.eye(PACK, dtype=jnp.float32)
    w1_blk = jnp.kron(eye, params["w1"]).astype(jnp.bfloat16)   # (4*Din, 4*Dout)
    b1_blk = jnp.tile(params["b1"], (1, PACK))                  # (1, 4*Dout)
    w2_blk = jnp.kron(eye, params["w2"])                        # (4*Dout, 4*Dout) f32
    b2_blk = jnp.tile(params["b2"], (1, PACK))                  # (1, 4*Dout)

    out = code_tokens_embedder_pallas(x, w1_blk, b1_blk, w2_blk, b2_blk,
                                      block_tokens=block_tokens)
    return out.reshape(B, S, Dout)


def reference_forward(params, token_type, kos_token_index,
                      identifier_index, encoded_identifiers):
    """Pure-JAX reference mirroring the kernel math (bf16 layer-1 inputs,
       f32 accumulation) for a tight numerical check."""
    B, S = token_type.shape
    feats = _gather_and_select(params, token_type, kos_token_index,
                               identifier_index, encoded_identifiers)
    h = jnp.dot(feats.astype(jnp.bfloat16),
                params["w1"].astype(jnp.bfloat16),
                preferred_element_type=jnp.float32) + params["b1"]
    h = jnp.maximum(h, 0.0)
    h2 = jnp.dot(h, params["w2"],
                 preferred_element_type=jnp.float32) + params["b2"]
    h2 = jnp.maximum(h2, 0.0)
    return h2.reshape(B, S, -1)


def init_params(key, token_type_embedding_dim, kos_token_embedding_dim,
                token_encoding_dim):
    Dt, Dk, Dout = token_type_embedding_dim, kos_token_embedding_dim, token_encoding_dim
    ks = jax.random.split(key, 6)
    kinds_table = 0.02 * jax.random.normal(ks[0], (NUM_TOKEN_KINDS, Dt), jnp.float32)
    kinds_table = kinds_table.at[KIND_PAD].set(0.0)            # padding_idx row
    kos_table = 0.02 * jax.random.normal(ks[1], (KOS_VOCAB_SIZE, Dk), jnp.float32)
    kos_table = kos_table.at[KOS_PAD_IDX].set(0.0)             # padding_idx row
    # projection: Linear(Dt + Dk -> Dout), stored transposed (in, out).
    w1 = (1.0 / jnp.sqrt(Dt + Dk)) * jax.random.normal(ks[2], (Dt + Dk, Dout), jnp.float32)
    b1 = (1.0 / jnp.sqrt(Dt + Dk)) * jax.random.normal(ks[3], (1, Dout), jnp.float32)
    # one additional linear layer (nr_out_linear_layers = 2)
    w2 = (1.0 / jnp.sqrt(Dout)) * jax.random.normal(ks[4], (Dout, Dout), jnp.float32)
    b2 = (1.0 / jnp.sqrt(Dout)) * jax.random.normal(ks[5], (1, Dout), jnp.float32)
    return dict(kinds_table=kinds_table, kos_table=kos_table,
                w1=w1, b1=b1, w2=w2, b2=b2)


if __name__ == "__main__":
    # Small shapes consistent with the module's forward.
    B, S = 2, 64                 # token_type: (B, S)
    Dt = 16                      # token_type_embedding_dim
    Dk = 32                      # kos_token_embedding_dim == identifier_embedding_dim
    Dout = 32                    # token_encoding_dim
    NUM_IDENTIFIERS = 10

    key = jax.random.PRNGKey(0)
    k_tt, k_idx1, k_idx2, k_enc, k_par = jax.random.split(key, 5)

    token_type = jax.random.randint(k_tt, (B, S), 0, NUM_TOKEN_KINDS, jnp.int32)

    # masked_scatter sources must have exactly as many rows as mask-True tokens
    n_id = int(jnp.sum(token_type == KIND_IDENTIFIER))
    n_kos = int(jnp.sum((token_type == KIND_OPERATOR)
                        | (token_type == KIND_SEPARATOR)
                        | (token_type == KIND_KEYWORD)))
    identifier_index = jax.random.randint(k_idx1, (max(n_id, 1),),
                                          0, NUM_IDENTIFIERS, jnp.int32)
    kos_token_index = jax.random.randint(k_idx2, (max(n_kos, 1),),
                                         1, KOS_VOCAB_SIZE, jnp.int32)
    encoded_identifiers = jax.random.normal(k_enc, (NUM_IDENTIFIERS, Dk), jnp.float32)

    params = init_params(k_par, Dt, Dk, Dout)

    out = code_tokens_embedder_forward(params, token_type, kos_token_index,
                                       identifier_index, encoded_identifiers)
    out = jax.block_until_ready(out)

    ref = reference_forward(params, token_type, kos_token_index,
                            identifier_index, encoded_identifiers)
    assert out.shape == (B, S, Dout)
    assert jnp.allclose(out, ref, atol=1e-3, rtol=1e-3)

    # TODO(synk): dropout is treated as identity (eval mode); add
    # pltpu.prng_random_bits-based masking if training-mode dropout is needed.
    print("KERNEL_OK")
</pallas_src>

<mosaic_0001>
module attributes {stable_mosaic.version = 11 : i64} {
  func.func @_embedder_kernel(%arg0: i32, %arg1: memref<32x192xbf16, #tpu.memory_space<vmem>>, %arg2: memref<192x128xbf16, #tpu.memory_space<vmem>>, %arg3: memref<1x128xf32, #tpu.memory_space<vmem>>, %arg4: memref<128x128xf32, #tpu.memory_space<vmem>>, %arg5: memref<1x128xf32, #tpu.memory_space<vmem>>, %arg6: memref<32x128xf32, #tpu.memory_space<vmem>>) attributes {dimension_semantics = [#tpu.dimension_semantics<parallel>], iteration_bounds = array<i64: 1>, scalar_prefetch = 0 : i64, scratch_operands = 0 : i64, tpu.core_type = #tpu.core_type<tc>, window_params = [{transform_indices = @transform_0, window_bounds = array<i64: 32, 192>}, {pipeline_mode = #tpu.pipeline_mode<synchronous>, transform_indices = @transform_1, window_bounds = array<i64: 192, 128>}, {pipeline_mode = #tpu.pipeline_mode<synchronous>, transform_indices = @transform_2, window_bounds = array<i64: 1, 128>}, {pipeline_mode = #tpu.pipeline_mode<synchronous>, transform_indices = @transform_3, window_bounds = array<i64: 128, 128>}, {pipeline_mode = #tpu.pipeline_mode<synchronous>, transform_indices = @transform_4, window_bounds = array<i64: 1, 128>}, {transform_indices = @transform_5, window_bounds = array<i64: 32, 128>}]} {
    %c0 = arith.constant 0 : index
    %c0_0 = arith.constant 0 : index
    %0 = vector.load %arg1[%c0, %c0_0] : memref<32x192xbf16, #tpu.memory_space<vmem>>, vector<32x192xbf16>
    %c0_1 = arith.constant 0 : index
    %c0_2 = arith.constant 0 : index
    %1 = vector.load %arg2[%c0_1, %c0_2] : memref<192x128xbf16, #tpu.memory_space<vmem>>, vector<192x128xbf16>
    %cst = arith.constant dense<0.000000e+00> : vector<32x128xf32>
    %2 = tpu.matmul %0, %1, %cst {dimension_numbers = #tpu.dot_dimension_numbers<[1], [0], [0], [1], [0, 0, 1, 1], [], []>} : vector<32x192xbf16>, vector<192x128xbf16>, vector<32x128xf32> -> vector<32x128xf32>
    %c0_3 = arith.constant 0 : index
    %c0_4 = arith.constant 0 : index
    %3 = vector.load %arg3[%c0_3, %c0_4] : memref<1x128xf32, #tpu.memory_space<vmem>>, vector<1x128xf32>
    %4 = vector.broadcast %3 : vector<1x128xf32> to vector<32x128xf32>
    %5 = arith.addf %2, %4 : vector<32x128xf32>
    %cst_5 = arith.constant 0.000000e+00 : f32
    %6 = vector.broadcast %cst_5 : f32 to vector<32x128xf32>
    %7 = arith.maximumf %5, %6 : vector<32x128xf32>
    %c0_6 = arith.constant 0 : index
    %c0_7 = arith.constant 0 : index
    %8 = vector.load %arg4[%c0_6, %c0_7] : memref<128x128xf32, #tpu.memory_space<vmem>>, vector<128x128xf32>
    %cst_8 = arith.constant dense<0.000000e+00> : vector<32x128xf32>
    %9 = tpu.matmul %7, %8, %cst_8 {dimension_numbers = #tpu.dot_dimension_numbers<[1], [0], [0], [1], [0, 0, 1, 1], [], []>} : vector<32x128xf32>, vector<128x128xf32>, vector<32x128xf32> -> vector<32x128xf32>
    %c0_9 = arith.constant 0 : index
    %c0_10 = arith.constant 0 : index
    %10 = vector.load %arg5[%c0_9, %c0_10] : memref<1x128xf32, #tpu.memory_space<vmem>>, vector<1x128xf32>
    %11 = vector.broadcast %10 : vector<1x128xf32> to vector<32x128xf32>
    %12 = arith.addf %9, %11 : vector<32x128xf32>
    %cst_11 = arith.constant 0.000000e+00 : f32
    %13 = vector.broadcast %cst_11 : f32 to vector<32x128xf32>
    %14 = arith.maximumf %12, %13 : vector<32x128xf32>
    %c0_12 = arith.constant 0 : index
    %c0_13 = arith.constant 0 : index
    %15 = vector.load %arg6[%c0_12, %c0_13] : memref<32x128xf32, #tpu.memory_space<vmem>>, vector<32x128xf32>
    tpu.vector_store %arg6[%c0_12, %c0_13], %14 {strides = array<i32>} : memref<32x128xf32, #tpu.memory_space<vmem>>, vector<32x128xf32>,
    return
  }
  func.func @transform_0(%arg0: i32) -> (i32, i32) {
    %c0_i32 = arith.constant 0 : i32
    %c0_i32_0 = arith.constant 0 : i32
    return %arg0, %c0_i32 : i32, i32
  }
  func.func @transform_1(%arg0: i32) -> (i32, i32) {
    %c0_i32 = arith.constant 0 : i32
    %c0_i32_0 = arith.constant 0 : i32
    %c0_i32_1 = arith.constant 0 : i32
    return %c0_i32, %c0_i32_0 : i32, i32
  }
  func.func @transform_2(%arg0: i32) -> (i32, i32) {
    %c0_i32 = arith.constant 0 : i32
    %c0_i32_0 = arith.constant 0 : i32
    %c0_i32_1 = arith.constant 0 : i32
    return %c0_i32, %c0_i32_0 : i32, i32
  }
  func.func @transform_3(%arg0: i32) -> (i32, i32) {
    %c0_i32 = arith.constant 0 : i32
    %c0_i32_0 = arith.constant 0 : i32
    %c0_i32_1 = arith.constant 0 : i32
    return %c0_i32, %c0_i32_0 : i32, i32
  }
  func.func @transform_4(%arg0: i32) -> (i32, i32) {
    %c0_i32 = arith.constant 0 : i32
    %c0_i32_0 = arith.constant 0 : i32
    %c0_i32_1 = arith.constant 0 : i32
    return %c0_i32, %c0_i32_0 : i32, i32
  }
  func.func @transform_5(%arg0: i32) -> (i32, i32) {
    %c0_i32 = arith.constant 0 : i32
    %c0_i32_0 = arith.constant 0 : i32
    return %arg0, %c0_i32 : i32, i32
  }
}

</mosaic_0001>

<llo_original>
// kernel: tpu_custom_call.1
$region0: #{tpu_custom_call.1}
  #allocation0 [shape = 'u32[]', space=smem, size = 0x4, offset = 0x4, fixed_abs, tag = 'smem constant byte address 0x4 - core index']
  #allocation1 [shape = 'u32[144,128]{1,0:T(1,128)}', space=vmem, size = 0x12000, scoped, tag = 'internal scratch']
  %s0 = inlined_call_operand.hbm [shape: bf16[32,192], index: 0, kind: input, shape index: {}]
  %s1 = inlined_call_operand.hbm [shape: bf16[192,128], index: 1, kind: input, shape index: {}]
  %s2 = inlined_call_operand.vmem [shape: f32[1,128], index: 2, kind: input, shape index: {}]
  %s3 = inlined_call_operand.hbm [shape: f32[128,128], index: 3, kind: input, shape index: {}]
  %s4 = inlined_call_operand.vmem [shape: f32[1,128], index: 4, kind: input, shape index: {}]
  %s5 = inlined_call_operand.hbm [shape: f32[32,128], index: 5, kind: output, shape index: {}]
  %s6 = sld [smem:[#allocation0]]
  $region42: #{tpu_custom_call.1} parent=0
    _
  %s8 = ssub.s32 1, %s6
  %s9 = scalar_select 0, %s8, %s6
  $region1: #{tpu_custom_call.1} parent=0
    #allocation2 [shape = 'u8[16384]{0}', space=vmem, size = 0x4000, scoped, tag = 'input window, operand 0, single buffered']
    #allocation3 [shape = 's32[1]{0}', space=sflag, size = 0x4, scoped, tag = 'scoped memory for tpu_custom_call.1']
    #allocation4 [shape = 's32[1]{0}', space=sflag, size = 0x4, scoped, tag = 'scoped memory for tpu_custom_call.1']
    #allocation5 [shape = 'u8[49152]{0}', space=vmem, size = 0xc000, scoped, tag = 'input window, operand 1, single buffered']
    #allocation6 [shape = 's32[1]{0}', space=sflag, size = 0x4, scoped, tag = 'scoped memory for tpu_custom_call.1']
    #allocation7 [shape = 'u8[65536]{0}', space=vmem, size = 0x10000, scoped, tag = 'input window, operand 3, single buffered']
    #allocation8 [shape = 'u8[16384]{0}', space=vmem, size = 0x4000, scoped, tag = 'output window, operand 0, single buffered']
    %10 = vsyncpa [#allocation3], 0
    %11 = vsyncpa [#allocation6], 0
    %12 = vsyncpa [#allocation4], 0
    // Predicated region
    $region2: #{tpu_custom_call.1} parent=1 // pred_check
      _
    $region3: #{tpu_custom_call.1} parent=1 // pred_check_branch
      %14 = sbr.rel (0) target = $region5
    $region4: #{tpu_custom_call.1} parent=1 // pred_region
      %s16 = ssub.s32 512, 512
      %17 = vsyncadd [#allocation3], %s16
      %s18 = sshll.u32 [#allocation2], 4
      %s19 = int_to_ptr.vmem [resolvable:$true] %s18
      %24 = dma.hbm_to_vmem [thread:$0]  %s0, 512, %s19, [#allocation3], 128, 128, 8
    $region5: #{tpu_custom_call.1} parent=1 // pred_fallthru
      _
    // Predicated region
    $region6: #{tpu_custom_call.1} parent=1 // pred_check
      _
    $region7: #{tpu_custom_call.1} parent=1 // pred_check_branch
      %26 = sbr.rel (0) target = $region9
    $region8: #{tpu_custom_call.1} parent=1 // pred_region
      %s28 = ssub.s32 1536, 1536
      %29 = vsyncadd [#allocation6], %s28
      %s30 = sshll.u32 [#allocation5], 4
      %s31 = int_to_ptr.vmem [resolvable:$true] %s30
      %36 = dma.hbm_to_vmem [thread:$0]  %s1, 1536, %s31, [#allocation6], 64, 64, 4
    $region9: #{tpu_custom_call.1} parent=1 // pred_fallthru
      _
    // Predicated region
    $region10: #{tpu_custom_call.1} parent=1 // pred_check
      _
    $region11: #{tpu_custom_call.1} parent=1 // pred_check_branch
      %38 = sbr.rel (0) target = $region13
    $region12: #{tpu_custom_call.1} parent=1 // pred_region
      _
    $region13: #{tpu_custom_call.1} parent=1 // pred_fallthru
      _
    // Predicated region
    $region14: #{tpu_custom_call.1} parent=1 // pred_check
      _
    $region15: #{tpu_custom_call.1} parent=1 // pred_check_branch
      %40 = sbr.rel (0) target = $region17
    $region16: #{tpu_custom_call.1} parent=1 // pred_region
      %s42 = ssub.s32 2048, 2048
      %43 = vsyncadd [#allocation6], %s42
      %s44 = sshll.u32 [#allocation7], 4
      %s45 = int_to_ptr.vmem [resolvable:$true] %s44
      %50 = dma.hbm_to_vmem [thread:$0]  %s3, 2048, %s45, [#allocation6], 128, 128, 8
    $region17: #{tpu_custom_call.1} parent=1 // pred_fallthru
      _
    // Predicated region
    $region18: #{tpu_custom_call.1} parent=1 // pred_check
      _
    $region19: #{tpu_custom_call.1} parent=1 // pred_check_branch
      %52 = sbr.rel (0) target = $region21
    $region20: #{tpu_custom_call.1} parent=1 // pred_region
      _
    $region21: #{tpu_custom_call.1} parent=1 // pred_fallthru
      _
    // Predicated region
    $region22: #{tpu_custom_call.1} parent=1 // pred_check
      _
    $region23: #{tpu_custom_call.1} parent=1 // pred_check_branch
      %54 = sbr.rel (0) target = $region25
    $region24: #{tpu_custom_call.1} parent=1 // pred_region
      %55 = dma.done [#allocation3], 512
    $region25: #{tpu_custom_call.1} parent=1 // pred_fallthru
      _
    // Predicated region
    $region26: #{tpu_custom_call.1} parent=1 // pred_check
      _
    $region27: #{tpu_custom_call.1} parent=1 // pred_check_branch
      %57 = sbr.rel (0) target = $region29
    $region28: #{tpu_custom_call.1} parent=1 // pred_region
      %58 = dma.done [#allocation6], 1536
    $region29: #{tpu_custom_call.1} parent=1 // pred_fallthru
      _
    // Predicated region
    $region30: #{tpu_custom_call.1} parent=1 // pred_check
      _
    $region31: #{tpu_custom_call.1} parent=1 // pred_check_branch
      %60 = sbr.rel (0) target = $region33
    $region32: #{tpu_custom_call.1} parent=1 // pred_region
      %61 = dma.done [#allocation6], 2048
    $region33: #{tpu_custom_call.1} parent=1 // pred_fallthru
      _
    %v63 = vld [vmem:[#allocation2] sm:$0xff]
    %v64 = vld [vmem:[#allocation2 + $0x8] sm:$0xff]
    %v65 = vld [vmem:[#allocation2 + $0x10] sm:$0xff]
    %v66 = vld [vmem:[#allocation2 + $0x18] sm:$0xff]
    %v67 = vld [vmem:[#allocation5] sm:$0xf]
    %v68 = vld [vmem:[#allocation5 + $0x4] sm:$0xf]
    %v69 = vld [vmem:[#allocation5 + $0x8] sm:$0xf]
    %v70 = vld [vmem:[#allocation5 + $0xc] sm:$0xf]
    %v71 = vld [vmem:[#allocation5 + $0x10] sm:$0xf]
    %v72 = vld [vmem:[#allocation5 + $0x14] sm:$0xf]
    %v73 = vld [vmem:[#allocation5 + $0x18] sm:$0xf]
    %v74 = vld [vmem:[#allocation5 + $0x1c] sm:$0xf]
    %v75 = vld [vmem:[#allocation5 + $0x20] sm:$0xf]
    %v76 = vld [vmem:[#allocation5 + $0x24] sm:$0xf]
    %v77 = vld [vmem:[#allocation5 + $0x28] sm:$0xf]
    %v78 = vld [vmem:[#allocation5 + $0x2c] sm:$0xf]
    %v79 = vld [vmem:[#allocation5 + $0x30] sm:$0xf]
    %v80 = vld [vmem:[#allocation5 + $0x34] sm:$0xf]
    %v81 = vld [vmem:[#allocation5 + $0x38] sm:$0xf]
    %v82 = vld [vmem:[#allocation5 + $0x3c] sm:$0xf]
    %v83 = vld [vmem:[#allocation5 + $0x40] sm:$0xf]
    %v84 = vld [vmem:[#allocation5 + $0x44] sm:$0xf]
    %v85 = vld [vmem:[#allocation5 + $0x48] sm:$0xf]
    %v86 = vld [vmem:[#allocation5 + $0x4c] sm:$0xf]
    %v87 = vld [vmem:[#allocation5 + $0x50] sm:$0xf]
    %v88 = vld [vmem:[#allocation5 + $0x54] sm:$0xf]
    %v89 = vld [vmem:[#allocation5 + $0x58] sm:$0xf]
    %v90 = vld [vmem:[#allocation5 + $0x5c] sm:$0xf]
    %v91 = vld [vmem:[%s2] sm:$0x1]
    %v93 = vlaneseq
    %v94 = vshrl.u32 %v93, 7
    %v95 = vsub.s32 0, %v94
    %v96 = vrot.slane %v91, %v95
    %v102 = vunpack.c.l.b16 %v63
    %v103 = vunpack.c.h.b16 %v63
    %v104 = vunpack.c.l.b16 %v64
    %v105 = vunpack.c.h.b16 %v64
    %v106 = vunpack.c.l.b16 %v65
    %v107 = vunpack.c.h.b16 %v65
    %v108 = vunpack.c.l.b16 %v66
    %v109 = vunpack.c.h.b16 %v66
    %v110 = vpack.c.b16 %v104, %v102
    %v111 = vpack.c.b16 %v105, %v103
    %v112 = vpack.c.b16 %v108, %v106
    %v113 = vpack.c.b16 %v109, %v107
    %v140 = vunpack.c.l.b16 %v67
    %v141 = vunpack.c.l.b16 %v68
    %v142 = vunpack.c.l.b16 %v69
    %v143 = vunpack.c.l.b16 %v70
    %v144 = vunpack.c.l.b16 %v71
    %v145 = vunpack.c.l.b16 %v72
    %v146 = vunpack.c.l.b16 %v73
    %v147 = vunpack.c.l.b16 %v74
    %v148 = vunpack.c.l.b16 %v75
    %v149 = vunpack.c.l.b16 %v76
    %v150 = vunpack.c.l.b16 %v77
    %v151 = vunpack.c.l.b16 %v78
    %v152 = vunpack.c.l.b16 %v79
    %v153 = vunpack.c.l.b16 %v80
    %v154 = vunpack.c.l.b16 %v81
    %v155 = vunpack.c.l.b16 %v82
    %v156 = vunpack.c.l.b16 %v83
    %v157 = vunpack.c.l.b16 %v84
    %v158 = vunpack.c.l.b16 %v85
    %v159 = vunpack.c.l.b16 %v86
    %v160 = vunpack.c.l.b16 %v87
    %v161 = vunpack.c.l.b16 %v88
    %v162 = vunpack.c.l.b16 %v89
    %v163 = vunpack.c.l.b16 %v90
    %v164 = vpack.c.b16 %v141, %v140
    %v165 = vpack.c.b16 %v143, %v142
    %v166 = vpack.c.b16 %v145, %v144
    %v167 = vpack.c.b16 %v147, %v146
    %v168 = vpack.c.b16 %v149, %v148
    %v169 = vpack.c.b16 %v151, %v150
    %v170 = vpack.c.b16 %v153, %v152
    %v171 = vpack.c.b16 %v155, %v154
    %v172 = vpack.c.b16 %v157, %v156
    %v173 = vpack.c.b16 %v159, %v158
    %v174 = vpack.c.b16 %v161, %v160
    %v175 = vpack.c.b16 %v163, %v162
    %vm188 = vcmask 523264
    %v190 = vsel %vm188, %v111, 0
    %v193 = vsel %vm188, %v113, 0
    %195 = vmatprep.subr.bf16.mxu0 0
    %196 = vmatpush1.bf16.msra.mxu0 %v171
    %197 = vmatprep.subr.bf16.mxu0 0
    %198 = vmatpush1.bf16.msra.mxu0 %v170
    %199 = vmatprep.subr.bf16.mxu0 0
    %200 = vmatpush1.bf16.msra.mxu0 %v169
    %201 = vmatprep.subr.bf16.mxu0 0
    %202 = vmatpush1.bf16.msra.mxu0 %v168
    %203 = vmatprep.subr.bf16.mxu0 0
    %204 = vmatpush1.bf16.msra.mxu0 %v167
    %205 = vmatprep.subr.bf16.mxu0 0
    %206 = vmatpush1.bf16.msra.mxu0 %v166
    %207 = vmatprep.subr.bf16.mxu0 0
    %208 = vmatpush1.bf16.msra.mxu0 %v165
    %209 = vmatprep.subr.bf16.mxu0 0
    %210 = vmatpush1.bf16.msra.mxu0 %v164
    %211 = vmatprep.subr.bf16.mxu0 0
    %212 = vmatpush2.bf16.msra.mxu0 0
    %213 = vmatprep.subr.bf16.mxu0 0
    %214 = vmatpush2.bf16.msra.mxu0 0
    %215 = vmatprep.subr.bf16.mxu0 0
    %216 = vmatpush2.bf16.msra.mxu0 0
    %217 = vmatprep.subr.bf16.mxu0 0
    %218 = vmatpush2.bf16.msra.mxu0 0
    %219 = vmatprep.subr.bf16.mxu0 0
    %220 = vmatpush2.bf16.msra.mxu0 %v175
    %221 = vmatprep.subr.bf16.mxu0 0
    %222 = vmatpush2.bf16.msra.mxu0 %v174
    %223 = vmatprep.subr.bf16.mxu0 0
    %224 = vmatpush2.bf16.msra.mxu0 %v173
    %225 = vmatprep.subr.bf16.mxu0 0
    %226 = vmatpush2.bf16.msra.mxu0 %v172
    %227 = vmatprep.mubr.bf16.mxu0 %v190
    %228 = vmatmul.mubr.bf16.gmra.mxu0 %v110
    %v229 = vpop.f32.mrf.mxu0
    %v230 = vadd.f32 %v96, %v229
    %v231 = vpop.f32.mrf.mxu0
    %v232 = vpop.f32.mrf.mxu0
    %v233 = vadd.f32 %v96, %v232
    %v234 = vpop.f32.mrf.mxu0
    %235 = vmatprep.mubr.bf16.mxu0 %v193
    %236 = vmatmul.mubr.bf16.gmra.mxu0 %v112
    %v237 = vpop.f32.mrf.mxu0
    %v238 = vadd.f32 %v96, %v237
    %v239 = vpop.f32.mrf.mxu0
    %v240 = vpop.f32.mrf.mxu0
    %v241 = vadd.f32 %v96, %v240
    %v242 = vpop.f32.mrf.mxu0
    %243 = vdwg.mxu0
    %v244 = vmax.f32 %v230, 0.0
    %v245 = vmax.f32 %v233, 0.0
    %v246 = vmax.f32 %v238, 0.0
    %v247 = vmax.f32 %v241, 0.0
    %v248 = vld [vmem:[#allocation7] sm:$0xff]
    %v249 = vld [vmem:[#allocation7 + $0x8] sm:$0xff]
    %v250 = vld [vmem:[#allocation7 + $0x10] sm:$0xff]
    %v251 = vld [vmem:[#allocation7 + $0x18] sm:$0xff]
    %v252 = vld [vmem:[#allocation7 + $0x20] sm:$0xff]
    %v253 = vld [vmem:[#allocation7 + $0x28] sm:$0xff]
    %v254 = vld [vmem:[#allocation7 + $0x30] sm:$0xff]
    %v255 = vld [vmem:[#allocation7 + $0x38] sm:$0xff]
    %v256 = vld [vmem:[#allocation7 + $0x40] sm:$0xff]
    %v257 = vld [vmem:[#allocation7 + $0x48] sm:$0xff]
    %v258 = vld [vmem:[#allocation7 + $0x50] sm:$0xff]
    %v259 = vld [vmem:[#allocation7 + $0x58] sm:$0xff]
    %v260 = vld [vmem:[#allocation7 + $0x60] sm:$0xff]
    %v261 = vld [vmem:[#allocation7 + $0x68] sm:$0xff]
    %v262 = vld [vmem:[#allocation7 + $0x70] sm:$0xff]
    %v263 = vld [vmem:[#allocation7 + $0x78] sm:$0xff]
    %v264 = vld [vmem:[%s4] sm:$0x1]
    %v266 = vlaneseq
    %v267 = vshrl.u32 %v266, 7
    %v268 = vsub.s32 0, %v267
    %v269 = vrot.slane %v264, %v268
    %271 = vmatprep.subr.mxu0 0.0
    %272 = vmatpush1.msra.mxu0 %v263
    %273 = vmatprep.subr.mxu0 0.0
    %274 = vmatpush1.msra.mxu0 %v262
    %275 = vmatprep.subr.mxu0 0.0
    %276 = vmatpush1.msra.mxu0 %v261
    %277 = vmatprep.subr.mxu0 0.0
    %278 = vmatpush1.msra.mxu0 %v260
    %279 = vmatprep.subr.mxu0 0.0
    %280 = vmatpush1.msra.mxu0 %v259
    %281 = vmatprep.subr.mxu0 0.0
    %282 = vmatpush1.msra.mxu0 %v258
    %283 = vmatprep.subr.mxu0 0.0
    %284 = vmatpush1.msra.mxu0 %v257
    %285 = vmatprep.subr.mxu0 0.0
    %286 = vmatpush1.msra.mxu0 %v256
    %287 = vmatprep.subr.mxu0 0.0
    %288 = vmatpush1.msra.mxu0 %v255
    %289 = vmatprep.subr.mxu0 0.0
    %290 = vmatpush1.msra.mxu0 %v254
    %291 = vmatprep.subr.mxu0 0.0
    %292 = vmatpush1.msra.mxu0 %v253
    %293 = vmatprep.subr.mxu0 0.0
    %294 = vmatpush1.msra.mxu0 %v252
    %295 = vmatprep.subr.mxu0 0.0
    %296 = vmatpush1.msra.mxu0 %v251
    %297 = vmatprep.subr.mxu0 0.0
    %298 = vmatpush1.msra.mxu0 %v250
    %299 = vmatprep.subr.mxu0 0.0
    %300 = vmatpush1.msra.mxu0 %v249
    %301 = vmatprep.subr.mxu0 0.0
    %302 = vmatpush1.msra.mxu0 %v248
    %303 = vmatprep.subr.mxu0 0.0
    %304 = vmatpush2.msra.mxu0 0.0
    %305 = vmatprep.subr.mxu0 0.0
    %306 = vmatpush2.msra.mxu0 0.0
    %307 = vmatprep.subr.mxu0 0.0
    %308 = vmatpush2.msra.mxu0 0.0
    %309 = vmatprep.subr.mxu0 0.0
    %310 = vmatpush2.msra.mxu0 0.0
    %311 = vmatprep.subr.mxu0 0.0
    %312 = vmatpush2.msra.mxu0 0.0
    %313 = vmatprep.subr.mxu0 0.0
    %314 = vmatpush2.msra.mxu0 0.0
    %315 = vmatprep.subr.mxu0 0.0
    %316 = vmatpush2.msra.mxu0 0.0
    %317 = vmatprep.subr.mxu0 0.0
    %318 = vmatpush2.msra.mxu0 0.0
    %319 = vmatprep.subr.mxu0 0.0
    %320 = vmatpush2.msra.mxu0 0.0
    %321 = vmatprep.subr.mxu0 0.0
    %322 = vmatpush2.msra.mxu0 0.0
    %323 = vmatprep.subr.mxu0 0.0
    %324 = vmatpush2.msra.mxu0 0.0
    %325 = vmatprep.subr.mxu0 0.0
    %326 = vmatpush2.msra.mxu0 0.0
    %327 = vmatprep.subr.mxu0 0.0
    %328 = vmatpush2.msra.mxu0 0.0
    %329 = vmatprep.subr.mxu0 0.0
    %330 = vmatpush2.msra.mxu0 0.0
    %331 = vmatprep.subr.mxu0 0.0
    %332 = vmatpush2.msra.mxu0 0.0
    %333 = vmatprep.subr.mxu0 0.0
    %334 = vmatpush2.msra.mxu0 0.0
    %335 = vmatprep.mubr.f32.mxu0 0.0
    %336 = vmatmul.mubr.f32.gmra.mxu0 %v244
    %v337 = vpop.f32.mrf.mxu0
    %v338 = vadd.f32 %v269, %v337
    %v339 = vpop.f32.mrf.mxu0
    %340 = vmatprep.mubr.f32.mxu0 0.0
    %341 = vmatmul.mubr.f32.gmra.mxu0 %v245
    %v342 = vpop.f32.mrf.mxu0
    %v343 = vadd.f32 %v269, %v342
    %v344 = vpop.f32.mrf.mxu0
    %345 = vmatprep.mubr.f32.mxu0 0.0
    %346 = vmatmul.mubr.f32.gmra.mxu0 %v246
    %v347 = vpop.f32.mrf.mxu0
    %v348 = vadd.f32 %v269, %v347
    %v349 = vpop.f32.mrf.mxu0
    %350 = vmatprep.mubr.f32.mxu0 0.0
    %351 = vmatmul.mubr.f32.gmra.mxu0 %v247
    %v352 = vpop.f32.mrf.mxu0
    %v353 = vadd.f32 %v269, %v352
    %v354 = vpop.f32.mrf.mxu0
    %355 = vdwg.mxu0
    %v356 = vmax.f32 %v338, 0.0
    %v357 = vmax.f32 %v343, 0.0
    %v358 = vmax.f32 %v348, 0.0
    %v359 = vmax.f32 %v353, 0.0
    %360 = vst [vmem:[#allocation8] sm:$0xff] %v356
    %361 = vst [vmem:[#allocation8 + $0x8] sm:$0xff] %v357
    %362 = vst [vmem:[#allocation8 + $0x10] sm:$0xff] %v358
    %363 = vst [vmem:[#allocation8 + $0x18] sm:$0xff] %v359
    // Predicated region
    $region34: #{tpu_custom_call.1} parent=1 // pred_check
      _
    $region35: #{tpu_custom_call.1} parent=1 // pred_check_branch
      %365 = sbr.rel (0) target = $region37
    $region36: #{tpu_custom_call.1} parent=1 // pred_region
      %s367 = ssub.s32 512, 512
      %368 = vsyncadd [#allocation4], %s367
      %s369 = sshll.u32 [#allocation8], 4
      %s370 = int_to_ptr.vmem [resolvable:$true] %s369
      %375 = dma.vmem_to_hbm [thread:$0]  %s370, 512, %s5, [#allocation4], 128, 128, 8
    $region37: #{tpu_custom_call.1} parent=1 // pred_fallthru
      _
    // Predicated region
    $region38: #{tpu_custom_call.1} parent=1 // pred_check
      _
    $region39: #{tpu_custom_call.1} parent=1 // pred_check_branch
      %377 = sbr.rel (0) target = $region41
    $region40: #{tpu_custom_call.1} parent=1 // pred_region
      %378 = dma.done [#allocation4], 512
    $region41: #{tpu_custom_call.1} parent=1 // pred_fallthru
      _
    %379 = vsyncpa [#allocation3], 1
    %380 = vsyncpa [#allocation6], 1
    %381 = vsyncpa [#allocation4], 1

</llo_original>
